<compile_context>
chip_gen: v7x
topology: tpu7x:2x2x1
jax: 0.10.0
libtpu: 0.0.40
codegen_flags: <defaults>
</compile_context>

<pallas_src>
import math

import jax
import jax.numpy as jnp
from jax.experimental import pallas as pl
from jax.experimental.pallas import tpu as pltpu


def _round_up(x, m):
    return (x + m - 1) // m * m


# Total-bytes budget (tables live double-buffered + scratch) under which the
# VMEM-resident fast path is used.  Conservative for v7x's 64 MiB VMEM.
_FAST_PATH_VMEM_BUDGET = 40 << 20
# Rows per DMA-issue chunk in the HBM fallback (bounds outstanding DMAs).
_GATHER_CHUNK = 64


# ----------------------------------------------------------------------------
# Fast path: both embedding tables resident in VMEM, gather via dynamic row
# reads (no DMA descriptors at all).
# ----------------------------------------------------------------------------
def _mf_vmem_kernel(uidx_ref, iidx_ref,      # scalar-prefetch indices (SMEM)
                    user_ref, item_ref,      # full tables, resident in VMEM
                    out_ref,                 # (1, tile_b) lane-dense output
                    pbuf):                   # (tile_b, D) f32 product scratch
    tile_b = pbuf.shape[0]
    base = pl.program_id(0) * tile_b

    @pl.loop(0, tile_b)
    def _(b):
        u = uidx_ref[base + b]
        i = iidx_ref[base + b]
        pbuf[pl.ds(b, 1), :] = (user_ref[pl.ds(u, 1), :].astype(jnp.float32) *
                                item_ref[pl.ds(i, 1), :].astype(jnp.float32))

    out_ref[0, :] = jnp.sum(pbuf[...], axis=1).astype(out_ref.dtype)


# ----------------------------------------------------------------------------
# Fallback: tables stay in HBM; chunked row-gather DMAs with bulk waits.
# ----------------------------------------------------------------------------
def _mf_hbm_kernel(uidx_ref, iidx_ref,       # scalar-prefetch indices (SMEM)
                   user_hbm, item_hbm,       # embedding tables (HBM, pl.ANY)
                   out_ref,                  # (1, tile_b) lane-dense output
                   ubuf, ibuf, sem):         # gather buffers + DMA semaphores
    tile_b = ubuf.shape[0]
    chunk = math.gcd(tile_b, _GATHER_CHUNK)
    n_chunks = tile_b // chunk
    base = pl.program_id(0) * tile_b

    def issue(c, slot):
        # One row-gather DMA per example of chunk `c`, on semaphore `slot`.
        @pl.loop(0, chunk)
        def _(r):
            row = c * chunk + r
            u = uidx_ref[base + row]
            i = iidx_ref[base + row]
            pltpu.make_async_copy(user_hbm.at[pl.ds(u, 1)],
                                  ubuf.at[pl.ds(row, 1)], sem.at[0, slot]).start()
            pltpu.make_async_copy(item_hbm.at[pl.ds(i, 1)],
                                  ibuf.at[pl.ds(row, 1)], sem.at[1, slot]).start()

    issue(0, 0)

    @pl.loop(0, n_chunks)
    def _(c):
        slot = c & 1

        @pl.when(c + 1 < n_chunks)
        def _():
            issue(c + 1, 1 - slot)

        # DMA semaphores count bytes: one bulk wait per table per chunk,
        # sized to exactly `chunk` row copies, consumes all of them at once.
        pltpu.make_async_copy(ubuf.at[pl.ds(0, chunk)],
                              ibuf.at[pl.ds(0, chunk)], sem.at[0, slot]).wait()
        pltpu.make_async_copy(ibuf.at[pl.ds(0, chunk)],
                              ubuf.at[pl.ds(0, chunk)], sem.at[1, slot]).wait()

    prod = ubuf[...].astype(jnp.float32) * ibuf[...].astype(jnp.float32)
    out_ref[0, :] = jnp.sum(prod, axis=1).astype(out_ref.dtype)


# ----------------------------------------------------------------------------
# Wrapper
# ----------------------------------------------------------------------------
def mf_score(x, user_table, item_table, *, tile_b=1024, force_hbm_gather=False):
    """out[b] = dot(user_table[x[b, 0]], item_table[x[b, 1]])  (Pallas TPU)."""
    B = x.shape[0]
    U, D = user_table.shape
    I, D2 = item_table.shape
    assert D == D2, "user/item latent dims must match"

    uidx = x[:, 0].astype(jnp.int32)
    iidx = x[:, 1].astype(jnp.int32)

    tile_b = max(8, min(int(tile_b), _round_up(B, 8)))
    tile_b = _round_up(tile_b, 8)
    b_pad = _round_up(B, tile_b)
    if b_pad != B:                           # pad with index 0 (always valid)
        uidx = jnp.pad(uidx, (0, b_pad - B))
        iidx = jnp.pad(iidx, (0, b_pad - B))
    n_tiles = b_pad // tile_b

    itemsize = jnp.dtype(user_table.dtype).itemsize
    table_bytes = (U + I) * D * itemsize
    pbuf_bytes = tile_b * D * 4                       # f32 product scratch
    fast_bytes = 2 * table_bytes + 2 * pbuf_bytes
    use_fast = (fast_bytes <= _FAST_PATH_VMEM_BUDGET) and not force_hbm_gather

    common = dict(
        out_shape=jax.ShapeDtypeStruct((n_tiles, tile_b), jnp.float32),
    )
    out_spec = pl.BlockSpec((1, tile_b), lambda t, uref, iref: (t, 0))

    if use_fast:
        vmem_limit = int(min(fast_bytes + (8 << 20), 64 << 20))
        out = pl.pallas_call(
            _mf_vmem_kernel,
            grid_spec=pltpu.PrefetchScalarGridSpec(
                num_scalar_prefetch=2,           # uidx, iidx -> SMEM
                grid=(n_tiles,),
                in_specs=[
                    pl.BlockSpec((U, D), lambda t, uref, iref: (0, 0)),
                    pl.BlockSpec((I, D), lambda t, uref, iref: (0, 0)),
                ],
                out_specs=out_spec,
                scratch_shapes=[pltpu.VMEM((tile_b, D), jnp.float32)],
            ),
            compiler_params=pltpu.CompilerParams(
                dimension_semantics=("parallel",),
                vmem_limit_bytes=vmem_limit,
            ),
            **common,
        )(uidx, iidx, user_table, item_table)
    else:
        gbuf_bytes = tile_b * D * itemsize
        vmem_limit = int(min(4 * gbuf_bytes + pbuf_bytes + (8 << 20), 64 << 20))
        out = pl.pallas_call(
            _mf_hbm_kernel,
            grid_spec=pltpu.PrefetchScalarGridSpec(
                num_scalar_prefetch=2,           # uidx, iidx -> SMEM
                grid=(n_tiles,),
                in_specs=[
                    pl.BlockSpec(memory_space=pl.ANY),   # user table in HBM
                    pl.BlockSpec(memory_space=pl.ANY),   # item table in HBM
                ],
                out_specs=out_spec,
                scratch_shapes=[
                    pltpu.VMEM((tile_b, D), user_table.dtype),
                    pltpu.VMEM((tile_b, D), item_table.dtype),
                    pltpu.SemaphoreType.DMA((2, 2)),
                ],
            ),
            compiler_params=pltpu.CompilerParams(
                dimension_semantics=("parallel",),
                vmem_limit_bytes=vmem_limit,
            ),
            **common,
        )(uidx, iidx, user_table, item_table)

    return out.reshape(-1)[:B]


class PreTrainPallas:
    """JAX/Pallas counterpart of Pre_Train (source + target MF models)."""

    def __init__(self, key, data_config, uid_s, iid_s, uid_t, iid_t):
        d = data_config['latent_dim']
        ku, ki, ku2, ki2 = jax.random.split(key, 4)
        self.src_user = 0.1 * jax.random.normal(ku, (uid_s, d), jnp.float32)
        self.src_item = 0.1 * jax.random.normal(ki, (iid_s + 1, d), jnp.float32)
        self.tgt_user = 0.1 * jax.random.normal(ku2, (uid_t, d), jnp.float32)
        self.tgt_item = 0.1 * jax.random.normal(ki2, (iid_t + 1, d), jnp.float32)

    def forward(self, x, stage, **kw):
        # Host-side Python control flow, mirrors the PyTorch stage dispatch.
        if stage == 'train_src':
            return mf_score(x, self.src_user, self.src_item, **kw)
        elif stage in ('train_tgt', 'test_tgt'):
            return mf_score(x, self.tgt_user, self.tgt_item, **kw)
        raise ValueError(f"unknown stage: {stage}")


if __name__ == "__main__":
    key = jax.random.PRNGKey(0)
    k_model, k_xs, k_xt = jax.random.split(key, 3)

    data_config = {'latent_dim': 32}
    uid_s, iid_s = 32, 48      # source-domain users / items
    uid_t, iid_t = 40, 60      # target-domain users / items

    model = PreTrainPallas(k_model, data_config, uid_s, iid_s, uid_t, iid_t)

    # --- source-domain batch (fast VMEM-resident path) -----------------------
    bs = 8
    x_src = jnp.stack([
        jax.random.randint(k_xs, (bs,), 0, uid_s),
        jax.random.randint(jax.random.fold_in(k_xs, 1), (bs,), 0, iid_s + 1),
    ], axis=1).astype(jnp.int32)
    out_src = jax.block_until_ready(model.forward(x_src, 'train_src'))
    ref_src = jnp.sum(model.src_user[x_src[:, 0]] * model.src_item[x_src[:, 1]],
                      axis=1)
    assert out_src.shape == (bs,)
    assert jnp.allclose(out_src, ref_src, atol=1e-5, rtol=1e-4)

    # --- target-domain batch: multi-tile grid + batch padding (fast path) ----
    bt = 20
    x_tgt = jnp.stack([
        jax.random.randint(k_xt, (bt,), 0, uid_t),
        jax.random.randint(jax.random.fold_in(k_xt, 1), (bt,), 0, iid_t + 1),
    ], axis=1).astype(jnp.int32)
    out_tgt = jax.block_until_ready(model.forward(x_tgt, 'test_tgt', tile_b=16))
    ref_tgt = jnp.sum(model.tgt_user[x_tgt[:, 0]] * model.tgt_item[x_tgt[:, 1]],
                      axis=1)
    assert out_tgt.shape == (bt,)
    assert jnp.allclose(out_tgt, ref_tgt, atol=1e-5, rtol=1e-4)

    # --- same batch, forcing the large-table HBM gather path (chunked DMAs,
    #     bulk per-chunk waits) so both code paths are validated --------------
    out_hbm = jax.block_until_ready(
        model.forward(x_tgt, 'test_tgt', force_hbm_gather=True))
    assert out_hbm.shape == (bt,)
    assert jnp.allclose(out_hbm, ref_tgt, atol=1e-5, rtol=1e-4)

    print("KERNEL_OK")
</pallas_src>

<mosaic_0001>
module attributes {stable_mosaic.version = 11 : i64} {
  func.func @_mf_vmem_kernel(%arg0: i32, %arg1: memref<8xi32, #tpu.memory_space<smem>>, %arg2: memref<8xi32, #tpu.memory_space<smem>>, %arg3: memref<32x32xf32, #tpu.memory_space<vmem>>, %arg4: memref<49x32xf32, #tpu.memory_space<vmem>>, %arg5: memref<1x8xf32, #tpu.memory_space<vmem>>, %arg6: memref<8x32xf32, #tpu.memory_space<vmem>>) attributes {dimension_semantics = [#tpu.dimension_semantics<parallel>], iteration_bounds = array<i64: 1>, scalar_prefetch = 2 : i64, scratch_operands = 1 : i64, tpu.core_type = #tpu.core_type<tc>, window_params = [{pipeline_mode = #tpu.pipeline_mode<synchronous>, transform_indices = @transform_0, window_bounds = array<i64: 32, 32>}, {pipeline_mode = #tpu.pipeline_mode<synchronous>, transform_indices = @transform_1, window_bounds = array<i64: 49, 32>}, {transform_indices = @transform_2, window_bounds = array<i64: 1, 8>}]} {
    %c8_i32 = arith.constant 8 : i32
    %0 = arith.muli %arg0, %c8_i32 : i32
    %c0_i32 = arith.constant 0 : i32
    %c8_i32_0 = arith.constant 8 : i32
    %1 = arith.addi %c0_i32, %c8_i32_0 : i32
    %c1_i32 = arith.constant 1 : i32
    scf.for %arg7 = %c0_i32 to %1 step %c1_i32  : i32 {
      %c1_i32_5 = arith.constant 1 : i32
      %7 = arith.muli %arg7, %c1_i32_5 : i32
      %c0_i32_6 = arith.constant 0 : i32
      %8 = arith.addi %c0_i32_6, %7 : i32
      %9 = arith.addi %0, %8 : i32
      %10 = arith.index_cast %9 : i32 to index
      %11 = memref.load %arg1[%10] : memref<8xi32, #tpu.memory_space<smem>>
      %12 = arith.addi %0, %8 : i32
      %13 = arith.index_cast %12 : i32 to index
      %14 = memref.load %arg2[%13] : memref<8xi32, #tpu.memory_space<smem>>
      %15 = arith.index_cast %11 : i32 to index
      %c0_7 = arith.constant 0 : index
      %16 = vector.load %arg3[%15, %c0_7] : memref<32x32xf32, #tpu.memory_space<vmem>>, vector<1x32xf32>
      %17 = arith.index_cast %14 : i32 to index
      %c0_8 = arith.constant 0 : index
      %18 = vector.load %arg4[%17, %c0_8] : memref<49x32xf32, #tpu.memory_space<vmem>>, vector<1x32xf32>
      %19 = arith.mulf %16, %18 : vector<1x32xf32>
      %20 = arith.index_cast %8 : i32 to index
      %c0_9 = arith.constant 0 : index
      %21 = vector.load %arg6[%20, %c0_9] : memref<8x32xf32, #tpu.memory_space<vmem>>, vector<1x32xf32>
      tpu.vector_store %arg6[%20, %c0_9], %19 {strides = array<i32>} : memref<8x32xf32, #tpu.memory_space<vmem>>, vector<1x32xf32>,
    }
    %c8_i32_1 = arith.constant 8 : i32
    %c0 = arith.constant 0 : index
    %c0_2 = arith.constant 0 : index
    %2 = vector.load %arg6[%c0, %c0_2] : memref<8x32xf32, #tpu.memory_space<vmem>>, vector<8x32xf32>
    %cst = arith.constant dense<0.000000e+00> : vector<8xf32>
    %3 = vector.multi_reduction <add>, %2, %cst [1] : vector<8x32xf32> to vector<8xf32>
    %c0_3 = arith.constant 0 : index
    %c0_4 = arith.constant 0 : index
    %4 = vector.load %arg5[%c0_3, %c0_4] : memref<1x8xf32, #tpu.memory_space<vmem>>, vector<1x8xf32>
    %5 = vector.shape_cast %4 : vector<1x8xf32> to vector<8xf32>
    %6 = vector.shape_cast %3 : vector<8xf32> to vector<1x8xf32>
    tpu.vector_store %arg5[%c0_3, %c0_4], %6 {strides = array<i32>} : memref<1x8xf32, #tpu.memory_space<vmem>>, vector<1x8xf32>,
    return
  }
  func.func @transform_0(%arg0: i32, %arg1: memref<8xi32, #tpu.memory_space<smem>>, %arg2: memref<8xi32, #tpu.memory_space<smem>>) -> (i32, i32) {
    %c0_i32 = arith.constant 0 : i32
    %c0_i32_0 = arith.constant 0 : i32
    %c0_i32_1 = arith.constant 0 : i32
    return %c0_i32, %c0_i32_0 : i32, i32
  }
  func.func @transform_1(%arg0: i32, %arg1: memref<8xi32, #tpu.memory_space<smem>>, %arg2: memref<8xi32, #tpu.memory_space<smem>>) -> (i32, i32) {
    %c0_i32 = arith.constant 0 : i32
    %c0_i32_0 = arith.constant 0 : i32
    %c0_i32_1 = arith.constant 0 : i32
    return %c0_i32, %c0_i32_0 : i32, i32
  }
  func.func @transform_2(%arg0: i32, %arg1: memref<8xi32, #tpu.memory_space<smem>>, %arg2: memref<8xi32, #tpu.memory_space<smem>>) -> (i32, i32) {
    %c0_i32 = arith.constant 0 : i32
    %c0_i32_0 = arith.constant 0 : i32
    return %arg0, %c0_i32 : i32, i32
  }
}

</mosaic_0001>

<llo_original>
// kernel: tpu_custom_call.1
$region0: #{tpu_custom_call.1}
  #allocation0 [shape = 'u32[]', space=smem, size = 0x4, offset = 0x4, fixed_abs, tag = 'smem constant byte address 0x4 - core index']
  #allocation1 [shape = 'u32[144,128]{1,0:T(1,128)}', space=vmem, size = 0x12000, scoped, tag = 'internal scratch']
  #allocation2 [shape = 'f32[8,32]{1,0:T(8,128)}', space=vmem, size = 0x1000, scoped, tag = 'scratch operand']
  #allocation3 [shape = 's32[1]{0}', space=sflag, size = 0x4, scoped, tag = 'scoped memory for tpu_custom_call.1']
  #allocation4 [shape = 'u8[512]{0}', space=smem, size = 0x200, scoped, tag = 'prefetched SMEM operand 0']
  #allocation5 [shape = 'u8[512]{0}', space=smem, size = 0x200, scoped, tag = 'prefetched SMEM operand 1']
  %s0 = inlined_call_operand.vmem [shape: s32[8], index: 0, kind: input, shape index: {}]
  %s1 = inlined_call_operand.vmem [shape: s32[8], index: 1, kind: input, shape index: {}]
  %s2 = inlined_call_operand.vmem [shape: f32[32,32], index: 2, kind: input, shape index: {}]
  %s3 = inlined_call_operand.vmem [shape: f32[49,32], index: 3, kind: input, shape index: {}]
  %s4 = inlined_call_operand.hbm [shape: f32[1,8], index: 4, kind: output, shape index: {}]
  %s5 = sld [smem:[#allocation0]]
  $region25: #{tpu_custom_call.1} parent=0
    _
  %s7 = ssub.s32 1, %s5
  %s8 = scalar_select 0, %s7, %s5
  %s9 = sshll.u32 %s0, 4
  %s10 = int_to_ptr.vmem [resolvable:$true] %s9
  %12 = dma.vmem_to_smem %s10, 16, [#allocation4], [#allocation3]
  %s13 = sshll.u32 %s1, 4
  %s14 = int_to_ptr.vmem [resolvable:$true] %s13
  %16 = dma.vmem_to_smem %s14, 16, [#allocation5], [#allocation3]
  %17 = dma.done [#allocation3], 32
  %18 = sfence
  $region1: #{tpu_custom_call.1} parent=0
    #allocation6 [shape = 'u8[512]{0}', space=vmem, size = 0x400, scoped, tag = 'output window, operand 0, single buffered']
    #allocation7 [shape = 's32[1]{0}', space=sflag, size = 0x4, scoped, tag = 'scoped memory for tpu_custom_call.1']
    %19 = vsyncpa [#allocation7], 0
    // Predicated region
    $region2: #{tpu_custom_call.1} parent=1 // pred_check
      _
    $region3: #{tpu_custom_call.1} parent=1 // pred_check_branch
      %21 = sbr.rel (0) target = $region5
    $region4: #{tpu_custom_call.1} parent=1 // pred_region
      _
    $region5: #{tpu_custom_call.1} parent=1 // pred_fallthru
      _
    // Predicated region
    $region6: #{tpu_custom_call.1} parent=1 // pred_check
      _
    $region7: #{tpu_custom_call.1} parent=1 // pred_check_branch
      %23 = sbr.rel (0) target = $region9
    $region8: #{tpu_custom_call.1} parent=1 // pred_region
      _
    $region9: #{tpu_custom_call.1} parent=1 // pred_fallthru
      _
    %s24 = smul.u32 0, 8
    loop: start=0, step=1, limit=8
    $region10: #{tpu_custom_call.1} parent=1 // loop_pre_header
      _
    $region11: #{tpu_custom_call.1} parent=1 // loop_header
      %s26 = sphi 0, %s30
      %p27 = scmp.ge.s32.totalorder %s26, 8
    $region12: #{tpu_custom_call.1} parent=1 // loop_header_branch
      %29 = sbr.rel (%p27) target = $region16
    $region13: #{tpu_custom_call.1} parent=1 // loop_body
      %s31 = sadd.s32 %s24, %s26
      %s32 = sld [smem:[#allocation4 + %s31]]
      %s33 = sld [smem:[#allocation5 + %s31]]
      %s34 = scalar_lea.vmem %s2, %s32
      %v35 = vld [vmem:[%s34] sm:$0x1]
      %s36 = scalar_lea.vmem %s3, %s33
      %v37 = vld [vmem:[%s36] sm:$0x1]
      %v38 = vmul.f32 %v35, %v37
      %s39 = scalar_lea.vmem [#allocation2], %s26
      %vm40 = vcmask 253952
      %41 = vst.msk [vmem:[%s39] sm:$0x1] %vm40, %v38
    $region14: #{tpu_custom_call.1} parent=1 // loop_footer
      %s30 = sadd.s32 1, %s26
    $region15: #{tpu_custom_call.1} parent=1 // loop_footer_branch
      %25 = sbr.rel target = $region11
    $region16: #{tpu_custom_call.1} parent=1 // loop_exit
      _
    %v42 = vld [vmem:[#allocation2] sm:$0xff]
    %vm43 = vcmask 261120
    %v44 = vsel %vm43, %v42, 0.0
    %45 = vadd.xlane.f32.xlu0 %v44
    %v46 = vpop.xlane.xlu0 %45
    %v48 = vlaneseq
    %v49 = vand.u32 %v48, 127
    %v50 = vlaneseq
    %v51 = vshrl.u32 %v50, 7
    %v52 = vsub.s32 %v49, %v51
    %v53 = vrot.slane %v46, %v52
    %vm55 = vcmask 57344
    %56 = vst.msk [vmem:[#allocation6] sm:$0x1] %vm55, %v53
    // Predicated region
    $region17: #{tpu_custom_call.1} parent=1 // pred_check
      _
    $region18: #{tpu_custom_call.1} parent=1 // pred_check_branch
      %58 = sbr.rel (0) target = $region20
    $region19: #{tpu_custom_call.1} parent=1 // pred_region
      %s60 = ssub.s32 16, 16
      %61 = vsyncadd [#allocation7], %s60
      %s63 = sshll.u32 [#allocation6], 4
      %s64 = int_to_ptr.vmem [resolvable:$true] %s63
      %66 = dma.vmem_to_hbm [thread:$0]  %s64, 16, %s4, [#allocation7]
    $region20: #{tpu_custom_call.1} parent=1 // pred_fallthru
      _
    // Predicated region
    $region21: #{tpu_custom_call.1} parent=1 // pred_check
      _
    $region22: #{tpu_custom_call.1} parent=1 // pred_check_branch
      %68 = sbr.rel (0) target = $region24
    $region23: #{tpu_custom_call.1} parent=1 // pred_region
      %69 = dma.done [#allocation7], 16
    $region24: #{tpu_custom_call.1} parent=1 // pred_fallthru
      _
    %70 = vsyncpa [#allocation7], 1

</llo_original>
